<compile_context>
chip_gen: v7x
topology: tpu7x:2x2x1
jax: 0.10.0
libtpu: 0.0.40
codegen_flags: <defaults>
</compile_context>

<pallas_src>
import functools

import jax
import jax.numpy as jnp
from jax import lax
from jax.experimental import pallas as pl
from jax.experimental.pallas import tpu as pltpu

KH = KW = 3  # fixed by the module


def _conv_gemm_kernel(p_ref, w_ref, o_ref):
    """One (image, group) grid step: a single fused K = 9*cg_in MXU contraction.

    p_ref: [K, M]      bf16 -- im2col patches (K on sublanes, M = Ho*Wo lane-dense).
    w_ref: [cg_out, K] bf16 -- per-group weights, tap-major K ordering.
    o_ref: [cg_out, M] f32  -- lane-dense output block (free NCHW reshape outside).
    """
    o_ref[...] = lax.dot_general(
        w_ref[...], p_ref[...],
        dimension_numbers=(((1,), (0,)), ((), ())),
        preferred_element_type=jnp.float32,
    )


def relu_grouped_conv2d(x_nchw, weight, *, groups=2):
    """ReLU(x) then Conv2d(C, C_out, 3x3, stride=2, pad=1, groups, bias=False), NCHW."""
    N, C, H, W = x_nchw.shape
    C_out, cg_in, kh_, kw_ = weight.shape
    assert (kh_, kw_) == (KH, KW)
    assert C_out % groups == 0 and C == cg_in * groups
    G = groups
    cg_out = C_out // G
    Ho = (H + 2 - KH) // 2 + 1          # works for odd spatial sizes too
    Wo = (W + 2 - KW) // 2 + 1
    K = KH * KW * cg_in                 # 144 for this module
    M = Ho * Wo

    # ---- wrapper glue: ONE fused XLA copy doing ReLU + zero-pad + stride-2
    # window extraction + group split + bf16 cast.
    #   P[n, g, k, m] = relu(x)_pad[n, g*cg_in + ci, 2i + kh, 2j + kw]
    #   with k = (kh*KW + kw)*cg_in + ci  and  m = i*Wo + j.
    xr = jnp.maximum(x_nchw, 0.0)                               # ReLU fused here (1x data)
    xp = jnp.pad(xr, ((0, 0), (0, 0), (1, 1), (1, 1)))
    taps = [xp[:, :, kh:kh + 2 * Ho - 1:2, kw:kw + 2 * Wo - 1:2]
            for kh in range(KH) for kw in range(KW)]            # 9 x [N, C, Ho, Wo]
    pat = jnp.stack(taps, axis=2)                               # [N, C, 9, Ho, Wo]
    pat = pat.reshape(N, G, cg_in, KH * KW, Ho, Wo)
    pat = pat.transpose(0, 1, 3, 2, 4, 5)                       # [N, G, 9, cg_in, Ho, Wo]
    pat = pat.reshape(N, G, K, M).astype(jnp.bfloat16)

    # weights OIHW -> [G, cg_out, K] bf16, K ordering matching the patches.
    wt = weight.reshape(G, cg_out, cg_in, KH, KW)
    wt = wt.transpose(0, 1, 3, 4, 2).reshape(G, cg_out, K).astype(jnp.bfloat16)

    out = pl.pallas_call(
        _conv_gemm_kernel,
        out_shape=jax.ShapeDtypeStruct((N, G, cg_out, M), jnp.float32),
        grid_spec=pltpu.PrefetchScalarGridSpec(
            num_scalar_prefetch=0,
            grid=(N, G),
            in_specs=[
                # Full [K, M] patch slab per (image, group); BlockSpec double-buffers
                # so the next (n, g) slab DMA overlaps this step's matmul.
                pl.BlockSpec((pl.Squeezed(), pl.Squeezed(), K, M),
                             lambda n, g: (n, g, 0, 0)),
                # Per-group weights (tiny), resident per step.
                pl.BlockSpec((pl.Squeezed(), cg_out, K),
                             lambda n, g: (g, 0, 0)),
            ],
            out_specs=pl.BlockSpec((pl.Squeezed(), pl.Squeezed(), cg_out, M),
                                   lambda n, g: (n, g, 0, 0)),
        ),
        compiler_params=pltpu.CompilerParams(
            dimension_semantics=("parallel", "parallel")),
        cost_estimate=pl.CostEstimate(
            flops=2 * N * G * cg_out * K * M,
            transcendentals=0,
            bytes_accessed=(pat.size * pat.dtype.itemsize
                            + wt.size * wt.dtype.itemsize
                            + N * G * cg_out * M * 4),
        ),
    )(pat, wt)

    # [N, G, cg_out, Ho*Wo] -> [N, C_out, Ho, Wo]: pure reshape (group-major channels,
    # exactly PyTorch's grouped-conv output channel ordering).
    return out.reshape(N, C_out, Ho, Wo)


if __name__ == "__main__":
    key = jax.random.PRNGKey(0)
    kx, kw_key = jax.random.split(key)

    # Small shapes consistent with the module: channels fixed at 32 / groups=2 by the
    # conv, batch 2, spatial 32 (vs 112 in the spec).  Inputs are pre-rounded to bf16
    # so the bf16-operand / f32-accumulate kernel can be checked tightly against the
    # f32 XLA reference.
    N, C, H, W = 2, 32, 32, 32
    x = jax.random.normal(kx, (N, C, H, W), dtype=jnp.float32)
    x = x.astype(jnp.bfloat16).astype(jnp.float32)
    w = jax.random.normal(kw_key, (32, 16, 3, 3), dtype=jnp.float32) * 0.1
    w = w.astype(jnp.bfloat16).astype(jnp.float32)

    y = jax.jit(relu_grouped_conv2d)(x, w)
    y = jax.block_until_ready(y)
    assert y.shape == (N, 32, H // 2, W // 2), y.shape

    # Cross-check against XLA's grouped conv applied to relu(x).
    ref = lax.conv_general_dilated(
        jnp.maximum(x, 0.0), w,
        window_strides=(2, 2), padding=((1, 1), (1, 1)),
        dimension_numbers=("NCHW", "OIHW", "NCHW"),
        feature_group_count=2,
        precision=lax.Precision.HIGHEST)
    ref = jax.block_until_ready(ref)
    err = float(jnp.max(jnp.abs(y - ref)))
    assert jnp.allclose(y, ref, rtol=1e-2, atol=1e-2), err
    print("KERNEL_OK")
</pallas_src>

<mosaic_0001>
module attributes {stable_mosaic.version = 11 : i64} {
  func.func @_conv_gemm_kernel(%arg0: i32, %arg1: i32, %arg2: memref<1x1x144x256xbf16, #tpu.memory_space<vmem>>, %arg3: memref<1x16x144xbf16, #tpu.memory_space<vmem>>, %arg4: memref<1x1x16x256xf32, #tpu.memory_space<vmem>>) attributes {dimension_semantics = [#tpu.dimension_semantics<parallel>, #tpu.dimension_semantics<parallel>], iteration_bounds = array<i64: 2, 2>, scalar_prefetch = 0 : i64, scratch_operands = 0 : i64, tpu.core_type = #tpu.core_type<tc>, window_params = [{transform_indices = @transform_0, window_bounds = array<i64: 1, 1, 144, 256>}, {transform_indices = @transform_1, window_bounds = array<i64: 1, 16, 144>}, {transform_indices = @transform_2, window_bounds = array<i64: 1, 1, 16, 256>}]} {
    %c0 = arith.constant 0 : index
    %c0_0 = arith.constant 0 : index
    %c0_1 = arith.constant 0 : index
    %0 = vector.load %arg3[%c0, %c0_0, %c0_1] : memref<1x16x144xbf16, #tpu.memory_space<vmem>>, vector<1x16x144xbf16>
    %1 = vector.shape_cast %0 : vector<1x16x144xbf16> to vector<16x144xbf16>
    %c0_2 = arith.constant 0 : index
    %c0_3 = arith.constant 0 : index
    %c0_4 = arith.constant 0 : index
    %c0_5 = arith.constant 0 : index
    %2 = vector.load %arg2[%c0_2, %c0_3, %c0_4, %c0_5] : memref<1x1x144x256xbf16, #tpu.memory_space<vmem>>, vector<1x1x144x256xbf16>
    %3 = vector.shape_cast %2 : vector<1x1x144x256xbf16> to vector<144x256xbf16>
    %cst = arith.constant dense<0.000000e+00> : vector<16x256xf32>
    %4 = tpu.matmul %1, %3, %cst {dimension_numbers = #tpu.dot_dimension_numbers<[1], [0], [0], [1], [0, 0, 1, 1], [], []>} : vector<16x144xbf16>, vector<144x256xbf16>, vector<16x256xf32> -> vector<16x256xf32>
    %c0_6 = arith.constant 0 : index
    %c0_7 = arith.constant 0 : index
    %c0_8 = arith.constant 0 : index
    %c0_9 = arith.constant 0 : index
    %5 = vector.load %arg4[%c0_6, %c0_7, %c0_8, %c0_9] : memref<1x1x16x256xf32, #tpu.memory_space<vmem>>, vector<1x1x16x256xf32>
    %6 = vector.shape_cast %5 : vector<1x1x16x256xf32> to vector<16x256xf32>
    %7 = vector.shape_cast %4 : vector<16x256xf32> to vector<1x1x16x256xf32>
    tpu.vector_store %arg4[%c0_6, %c0_7, %c0_8, %c0_9], %7 {strides = array<i32>} : memref<1x1x16x256xf32, #tpu.memory_space<vmem>>, vector<1x1x16x256xf32>,
    return
  }
  func.func @transform_0(%arg0: i32, %arg1: i32) -> (i32, i32, i32, i32) {
    %c0_i32 = arith.constant 0 : i32
    %c0_i32_0 = arith.constant 0 : i32
    %c0_i32_1 = arith.constant 0 : i32
    return %arg0, %arg1, %c0_i32, %c0_i32_0 : i32, i32, i32, i32
  }
  func.func @transform_1(%arg0: i32, %arg1: i32) -> (i32, i32, i32) {
    %c0_i32 = arith.constant 0 : i32
    %c0_i32_0 = arith.constant 0 : i32
    %c0_i32_1 = arith.constant 0 : i32
    return %arg1, %c0_i32, %c0_i32_0 : i32, i32, i32
  }
  func.func @transform_2(%arg0: i32, %arg1: i32) -> (i32, i32, i32, i32) {
    %c0_i32 = arith.constant 0 : i32
    %c0_i32_0 = arith.constant 0 : i32
    %c0_i32_1 = arith.constant 0 : i32
    return %arg0, %arg1, %c0_i32, %c0_i32_0 : i32, i32, i32, i32
  }
}

</mosaic_0001>

<llo_original>
// kernel: relu_grouped_conv2d.1
$region0: #{relu_grouped_conv2d.1}
  #allocation0 [shape = 'u32[]', space=smem, size = 0x4, offset = 0x4, fixed_abs, tag = 'smem constant byte address 0x4 - core index']
  #allocation1 [shape = 'u32[144,128]{1,0:T(1,128)}', space=vmem, size = 0x12000, scoped, tag = 'internal scratch']
  %s0 = inlined_call_operand.vmem [shape: bf16[2,2,144,256], index: 0, kind: input, shape index: {}]
  %s1 = inlined_call_operand.vmem [shape: bf16[2,16,144], index: 1, kind: input, shape index: {}]
  %s2 = inlined_call_operand.vmem [shape: f32[2,2,16,256], index: 2, kind: output, shape index: {}]
  %s3 = sld [smem:[#allocation0]]
  $region41: #{relu_grouped_conv2d.1} parent=0
    _
  %s5 = ssub.s32 1, %s3
  %s6 = scalar_select 0, %s5, %s3
  loop: start=0, step=1, limit=6
  $region2: #{relu_grouped_conv2d.1} parent=0 // loop_pre_header
    _
  $region3: #{relu_grouped_conv2d.1} parent=0 // loop_header
    %s8 = sphi 0, %s12
    %p9 = scmp.ge.s32.totalorder %s8, 6
    %s15 = sphi 0, %s27
    %s16 = sphi 0, %s23
    %s17 = sphi 0, %s15
    %s18 = sphi 0, %s16
    %s19 = sphi 0, %s17
    %s20 = sphi 0, %s18
    %s32 = sphi 0, %s34
    %s35 = sphi 0, %s32
    %s36 = sphi 0, %s35
    %s52 = sphi 0, %s36
    %s58 = sphi 0, %s60
    %s61 = sphi 0, %s58
    %s62 = sphi 0, %s61
    %s78 = sphi 0, %s62
    %s86 = sphi 0, %s88
    %s89 = sphi 0, %s86
    %s90 = sphi 0, %s89
    %s106 = sphi 0, %s90
  $region4: #{relu_grouped_conv2d.1} parent=0 // loop_header_branch
    %11 = sbr.rel (%p9) target = $region8
  $region5: #{relu_grouped_conv2d.1} parent=0 // loop_body
    %s13 = ssub.s32 %s8, 1
    %s14 = ssub.s32 %s8, 2
    %s21 = sadd.s32 1, %s16
    %p22 = scmp.ge.s32.totalorder %s21, 2
    %s23 = scalar_select %p22, 0, %s21
    %s24 = sadd.s32 1, %s15
    %s25 = scalar_select %p22, %s24, %s15
    %p26 = scmp.ge.s32.totalorder %s25, 2
    %s27 = scalar_select %p26, 0, %s25
    %s28 = ssub.s32 %s15, %s27
    %s29 = ssub.s32 %s16, %s23
    %s30 = sor.u32 %s28, %s29
    %p31 = scmp.eq.s32.totalorder %s30, 0
    %s33 = sadd.s32 %s32, 1
    %s34 = scalar_select %p31, %s32, %s33
    %p37 = pneg %p31
    %p38 = scmp.eq.s32.totalorder %s8, 3
    %p39 = por %p37, %p38
    %p40 = scmp.ne.s32.totalorder %s32, %s35
    %p41 = scmp.eq.s32.totalorder %s8, 0
    %p42 = por %p40, %p41
    %p43 = scmp.ne.s32.totalorder %s32, %s35
    %p44 = scmp.eq.s32.totalorder %s13, 3
    %p45 = por %p43, %p44
    %p46 = scmp.ne.s32.totalorder %s35, %s36
    %p47 = scmp.eq.s32.totalorder %s13, 0
    %p48 = por %p46, %p47
    %p49 = scmp.ne.s32.totalorder %s35, %s36
    %p50 = scmp.eq.s32.totalorder %s14, 3
    %p51 = por %p49, %p50
    %p53 = scmp.ne.s32.totalorder %s36, %s52
    %p54 = scmp.eq.s32.totalorder %s14, 0
    %p55 = por %p53, %p54
    %s56 = ssub.s32 %s16, %s23
    %p57 = scmp.eq.s32.totalorder %s56, 0
    %s59 = sadd.s32 %s58, 1
    %s60 = scalar_select %p57, %s58, %s59
    %p63 = pneg %p57
    %p64 = scmp.eq.s32.totalorder %s8, 3
    %p65 = por %p63, %p64
    %p66 = scmp.ne.s32.totalorder %s58, %s61
    %p67 = scmp.eq.s32.totalorder %s8, 0
    %p68 = por %p66, %p67
    %p69 = scmp.ne.s32.totalorder %s58, %s61
    %p70 = scmp.eq.s32.totalorder %s13, 3
    %p71 = por %p69, %p70
    %p72 = scmp.ne.s32.totalorder %s61, %s62
    %p73 = scmp.eq.s32.totalorder %s13, 0
    %p74 = por %p72, %p73
    %p75 = scmp.ne.s32.totalorder %s61, %s62
    %p76 = scmp.eq.s32.totalorder %s14, 3
    %p77 = por %p75, %p76
    %p79 = scmp.ne.s32.totalorder %s62, %s78
    %p80 = scmp.eq.s32.totalorder %s14, 0
    %p81 = por %p79, %p80
    %s82 = ssub.s32 %s15, %s27
    %s83 = ssub.s32 %s16, %s23
    %s84 = sor.u32 %s82, %s83
    %p85 = scmp.eq.s32.totalorder %s84, 0
    %s87 = sadd.s32 %s86, 1
    %s88 = scalar_select %p85, %s86, %s87
    %p91 = pneg %p85
    %p92 = scmp.eq.s32.totalorder %s8, 3
    %p93 = por %p91, %p92
    %p94 = scmp.ne.s32.totalorder %s86, %s89
    %p95 = scmp.eq.s32.totalorder %s8, 0
    %p96 = por %p94, %p95
    %p97 = scmp.ne.s32.totalorder %s86, %s89
    %p98 = scmp.eq.s32.totalorder %s13, 3
    %p99 = por %p97, %p98
    %p100 = scmp.ne.s32.totalorder %s89, %s90
    %p101 = scmp.eq.s32.totalorder %s13, 0
    %p102 = por %p100, %p101
    %p103 = scmp.ne.s32.totalorder %s89, %s90
    %p104 = scmp.eq.s32.totalorder %s14, 3
    %p105 = por %p103, %p104
    %p107 = scmp.ne.s32.totalorder %s90, %s106
    %p108 = scmp.eq.s32.totalorder %s14, 0
    %p109 = por %p107, %p108
    %p110 = scmp.le.s32.totalorder 1, %s8
    %p111 = scmp.lt.s32.totalorder %s8, 5
    %p112 = pnand %p110, %p111
    %p113 = pneg %p112
    // Predicated region
    $region9: #{relu_grouped_conv2d.1} parent=5 // pred_check
      _
    $region10: #{relu_grouped_conv2d.1} parent=5 // pred_check_branch
      %115 = sbr.rel (%p112) target = $region12
    $region11: #{relu_grouped_conv2d.1} parent=5 // pred_region
      %s116 = ssub.s32 %s8, 1
    $region12: #{relu_grouped_conv2d.1} parent=5 // pred_fallthru
      _
    %p117 = scmp.lt.s32.totalorder %s8, 4
    // Predicated region
    $region13: #{relu_grouped_conv2d.1} parent=5 // pred_check
      %p118 = pneg %p117
    $region14: #{relu_grouped_conv2d.1} parent=5 // pred_check_branch
      %120 = sbr.rel (%p118) target = $region16
    $region15: #{relu_grouped_conv2d.1} parent=5 // pred_region
      // Predicated region
      $region17: #{relu_grouped_conv2d.1} parent=15 // pred_check
        %p121 = pneg %p42
      $region18: #{relu_grouped_conv2d.1} parent=15 // pred_check_branch
        %123 = sbr.rel (%p121) target = $region20
      $region19: #{relu_grouped_conv2d.1} parent=15 // pred_region
        %p124 = scmp.lt.s32.totalorder %s15, 1
        %s125 = scalar_select %p124, %s15, 1
        %p126 = scmp.lt.s32.totalorder %s16, 1
        %s127 = scalar_select %p126, %s16, 1
        %s128 = smul.addr %s127, 36
        %s129 = smul.addr %s125, 72
        %s130 = sadd.s32 %s128, %s129
        %s131 = smul.addr %s130, 4
        %s132 = scalar_lea.vmem %s0, %s131
      $region20: #{relu_grouped_conv2d.1} parent=15 // pred_fallthru
        _
      // Predicated region
      $region21: #{relu_grouped_conv2d.1} parent=15 // pred_check
        %p133 = pneg %p68
      $region22: #{relu_grouped_conv2d.1} parent=15 // pred_check_branch
        %135 = sbr.rel (%p133) target = $region24
      $region23: #{relu_grouped_conv2d.1} parent=15 // pred_region
        %p136 = scmp.lt.s32.totalorder %s16, 1
        %s137 = scalar_select %p136, %s16, 1
        %s138 = smul.addr %s137, 4
        %s139 = smul.addr %s138, 4
        %s140 = scalar_lea.vmem %s1, %s139
      $region24: #{relu_grouped_conv2d.1} parent=15 // pred_fallthru
        _
    $region16: #{relu_grouped_conv2d.1} parent=5 // pred_fallthru
      _
    %p141 = scmp.le.s32.totalorder 1, %s8
    %p142 = scmp.lt.s32.totalorder %s8, 5
    %p143 = pnand %p141, %p142
    %p144 = pneg %p143
    // Predicated region
    $region25: #{relu_grouped_conv2d.1} parent=5 // pred_check
      _
    $region26: #{relu_grouped_conv2d.1} parent=5 // pred_check_branch
      %146 = sbr.rel (%p143) target = $region28
    $region27: #{relu_grouped_conv2d.1} parent=5 // pred_region
      %s147 = ssub.s32 %s8, 1
      %p148 = scmp.lt.s32.totalorder %s17, 1
      %s149 = scalar_select %p148, %s17, 1
      %p150 = scmp.lt.s32.totalorder %s18, 1
      %s151 = scalar_select %p150, %s18, 1
      %s152 = smul.addr %s151, 36
      %s153 = smul.addr %s149, 72
      %s154 = sadd.s32 %s152, %s153
      %s155 = smul.addr %s154, 4
      %s156 = scalar_lea.vmem %s0, %s155
      %p157 = pneg %p48
      %p158 = pneg %p45
      %p159 = scmp.lt.s32.totalorder %s18, 1
      %s160 = scalar_select %p159, %s18, 1
      %s161 = smul.addr %s160, 4
      %s162 = smul.addr %s161, 4
      %s163 = scalar_lea.vmem %s1, %s162
      %p164 = pneg %p74
      %p165 = pneg %p71
      %p166 = pneg %p102
      %p167 = pneg %p99
      %p168 = scmp.lt.s32.totalorder %s17, 1
      %s169 = scalar_select %p168, %s17, 1
      %p170 = scmp.lt.s32.totalorder %s18, 1
      %s171 = scalar_select %p170, %s18, 1
      %s172 = smul.addr %s171, 4
      %s173 = smul.addr %s169, 8
      %s174 = sadd.s32 %s172, %s173
      %s175 = smul.addr %s174, 8
      %s176 = scalar_lea.vmem %s2, %s175
      %p177 = scmp.lt.s32.totalorder %s17, 1
      %s178 = scalar_select %p177, %s17, 1
      %p179 = scmp.lt.s32.totalorder %s18, 1
      %s180 = scalar_select %p179, %s18, 1
      %s181 = smul.addr %s180, 36
      %s182 = smul.addr %s178, 72
      %s183 = sadd.s32 %s181, %s182
      %s184 = smul.addr %s183, 4
      %s185 = scalar_lea.vmem %s0, %s184
      %p186 = scmp.lt.s32.totalorder %s18, 1
      %s187 = scalar_select %p186, %s18, 1
      %s188 = smul.addr %s187, 4
      %s189 = smul.addr %s188, 4
      %s190 = scalar_lea.vmem %s1, %s189
      %p191 = scmp.lt.s32.totalorder %s17, 1
      %s192 = scalar_select %p191, %s17, 1
      %p193 = scmp.lt.s32.totalorder %s18, 1
      %s194 = scalar_select %p193, %s18, 1
      %s195 = smul.addr %s194, 4
      %s196 = smul.addr %s192, 8
      %s197 = sadd.s32 %s195, %s196
      %s198 = smul.addr %s197, 8
      %s199 = scalar_lea.vmem %s2, %s198
      %v201 = vld [vmem:[%s190] sm:$0xff]
      %v202 = vld [vmem:[%s190 + $0x8] sm:$0xff]
      %v203 = vld [vmem:[%s185] sm:$0xff]
      %v204 = vld [vmem:[%s185 + $0x8] sm:$0xff]
      %v205 = vld [vmem:[%s185 + $0x10] sm:$0xff]
      %v206 = vld [vmem:[%s185 + $0x18] sm:$0xff]
      %v207 = vld [vmem:[%s185 + $0x20] sm:$0xff]
      %v208 = vld [vmem:[%s185 + $0x28] sm:$0xff]
      %v209 = vld [vmem:[%s185 + $0x30] sm:$0xff]
      %v210 = vld [vmem:[%s185 + $0x38] sm:$0xff]
      %v211 = vld [vmem:[%s185 + $0x40] sm:$0xff]
      %v212 = vld [vmem:[%s185 + $0x48] sm:$0xff]
      %v213 = vld [vmem:[%s185 + $0x50] sm:$0xff]
      %v214 = vld [vmem:[%s185 + $0x58] sm:$0xff]
      %v215 = vld [vmem:[%s185 + $0x60] sm:$0xff]
      %v216 = vld [vmem:[%s185 + $0x68] sm:$0xff]
      %v217 = vld [vmem:[%s185 + $0x70] sm:$0xff]
      %v218 = vld [vmem:[%s185 + $0x78] sm:$0xff]
      %v219 = vld [vmem:[%s185 + $0x80] sm:$0xff]
      %v220 = vld [vmem:[%s185 + $0x88] sm:$0xff]
      %v223 = vunpack.c.l.b16 %v201
      %v224 = vunpack.c.h.b16 %v201
      %v225 = vunpack.c.l.b16 %v202
      %v226 = vunpack.c.h.b16 %v202
      %v227 = vpack.c.b16 %v225, %v223
      %v228 = vpack.c.b16 %v226, %v224
      %v248 = vunpack.c.l.b16 %v203
      %v249 = vunpack.c.h.b16 %v203
      %v250 = vunpack.c.l.b16 %v204
      %v251 = vunpack.c.h.b16 %v204
      %v252 = vunpack.c.l.b16 %v205
      %v253 = vunpack.c.h.b16 %v205
      %v254 = vunpack.c.l.b16 %v206
      %v255 = vunpack.c.h.b16 %v206
      %v256 = vunpack.c.l.b16 %v207
      %v257 = vunpack.c.h.b16 %v207
      %v258 = vunpack.c.l.b16 %v208
      %v259 = vunpack.c.h.b16 %v208
      %v260 = vunpack.c.l.b16 %v209
      %v261 = vunpack.c.h.b16 %v209
      %v262 = vunpack.c.l.b16 %v210
      %v263 = vunpack.c.h.b16 %v210
      %v264 = vunpack.c.l.b16 %v211
      %v265 = vunpack.c.h.b16 %v211
      %v266 = vunpack.c.l.b16 %v212
      %v267 = vunpack.c.h.b16 %v212
      %v268 = vunpack.c.l.b16 %v213
      %v269 = vunpack.c.h.b16 %v213
      %v270 = vunpack.c.l.b16 %v214
      %v271 = vunpack.c.h.b16 %v214
      %v272 = vunpack.c.l.b16 %v215
      %v273 = vunpack.c.h.b16 %v215
      %v274 = vunpack.c.l.b16 %v216
      %v275 = vunpack.c.h.b16 %v216
      %v276 = vunpack.c.l.b16 %v217
      %v277 = vunpack.c.h.b16 %v217
      %v278 = vunpack.c.l.b16 %v218
      %v279 = vunpack.c.h.b16 %v218
      %v280 = vunpack.c.l.b16 %v219
      %v281 = vunpack.c.h.b16 %v219
      %v282 = vunpack.c.l.b16 %v220
      %v283 = vunpack.c.h.b16 %v220
      %v284 = vpack.c.b16 %v250, %v248
      %v285 = vpack.c.b16 %v251, %v249
      %v286 = vpack.c.b16 %v254, %v252
      %v287 = vpack.c.b16 %v255, %v253
      %v288 = vpack.c.b16 %v258, %v256
      %v289 = vpack.c.b16 %v259, %v257
      %v290 = vpack.c.b16 %v262, %v260
      %v291 = vpack.c.b16 %v263, %v261
      %v292 = vpack.c.b16 %v266, %v264
      %v293 = vpack.c.b16 %v267, %v265
      %v294 = vpack.c.b16 %v270, %v268
      %v295 = vpack.c.b16 %v271, %v269
      %v296 = vpack.c.b16 %v274, %v272
      %v297 = vpack.c.b16 %v275, %v273
      %v298 = vpack.c.b16 %v278, %v276
      %v299 = vpack.c.b16 %v279, %v277
      %v300 = vpack.c.b16 %v282, %v280
      %v301 = vpack.c.b16 %v283, %v281
      %vm320 = vcmask 130048
      %v322 = vsel %vm320, %v228, 0
      %324 = vmatprep.subr.bf16.mxu0 %v285
      %325 = vmatpush1.bf16.msra.mxu0 %v284
      %326 = vmatprep.subr.bf16.mxu0 %v287
      %327 = vmatpush1.bf16.msra.mxu0 %v286
      %328 = vmatprep.subr.bf16.mxu0 %v289
      %329 = vmatpush1.bf16.msra.mxu0 %v288
      %330 = vmatprep.subr.bf16.mxu0 %v291
      %331 = vmatpush1.bf16.msra.mxu0 %v290
      %332 = vmatprep.subr.bf16.mxu0 %v293
      %333 = vmatpush1.bf16.msra.mxu0 %v292
      %334 = vmatprep.subr.bf16.mxu0 %v295
      %335 = vmatpush1.bf16.msra.mxu0 %v294
      %336 = vmatprep.subr.bf16.mxu0 %v297
      %337 = vmatpush1.bf16.msra.mxu0 %v296
      %338 = vmatprep.subr.bf16.mxu0 %v299
      %339 = vmatpush1.bf16.msra.mxu0 %v298
      %340 = vmatprep.subr.bf16.mxu0 %v301
      %341 = vmatpush1.bf16.msra.mxu0 %v300
      %342 = vmatprep.subr.bf16.mxu0 0
      %343 = vmatpush1.bf16.msra.mxu0 0
      %344 = vmatprep.subr.bf16.mxu0 0
      %345 = vmatpush1.bf16.msra.mxu0 0
      %346 = vmatprep.subr.bf16.mxu0 0
      %347 = vmatpush1.bf16.msra.mxu0 0
      %348 = vmatprep.subr.bf16.mxu0 0
      %349 = vmatpush1.bf16.msra.mxu0 0
      %350 = vmatprep.subr.bf16.mxu0 0
      %351 = vmatpush1.bf16.msra.mxu0 0
      %352 = vmatprep.subr.bf16.mxu0 0
      %353 = vmatpush1.bf16.msra.mxu0 0
      %354 = vmatprep.subr.bf16.mxu0 0
      %355 = vmatpush1.bf16.msra.mxu0 0
      %356 = vmatprep.mubr.bf16.mxu0 %v322
      %357 = vmatmul.mubr.bf16.gmra.mrb[0].mxu0 %v227
      %v358 = vpop.f32.mrb[0].mxu0
      %v359 = vadd.f32 0.0, %v358
      %v360 = vpop.f32.mrb[0].mxu0
      %v361 = vadd.f32 0.0, %v360
      %v362 = vpop.f32.mrb[0].mxu0
      %v363 = vadd.f32 0.0, %v362
      %v364 = vpop.f32.mrb[0].mxu0
      %v365 = vadd.f32 0.0, %v364
      %366 = vdwg.mxu0
      %367 = vst [vmem:[%s199] sm:$0xff] %v359
      %368 = vst [vmem:[%s199 + $0x8] sm:$0xff] %v361
      %369 = vst [vmem:[%s199 + $0x10] sm:$0xff] %v363
      %370 = vst [vmem:[%s199 + $0x18] sm:$0xff] %v365
      %p371 = scmp.lt.s32.totalorder %s17, 1
      %s372 = scalar_select %p371, %s17, 1
      %p373 = scmp.lt.s32.totalorder %s18, 1
      %s374 = scalar_select %p373, %s18, 1
      %s375 = smul.addr %s374, 4
      %s376 = smul.addr %s372, 8
      %s377 = sadd.s32 %s375, %s376
      %s378 = smul.addr %s377, 8
      %s379 = scalar_lea.vmem %s2, %s378
      // Predicated region
      $region29: #{relu_grouped_conv2d.1} parent=27 // pred_check
        %p380 = pneg %p99
      $region30: #{relu_grouped_conv2d.1} parent=27 // pred_check_branch
        %382 = sbr.rel (%p380) target = $region32
      $region31: #{relu_grouped_conv2d.1} parent=27 // pred_region
        _
      $region32: #{relu_grouped_conv2d.1} parent=27 // pred_fallthru
        _
    $region28: #{relu_grouped_conv2d.1} parent=5 // pred_fallthru
      _
    %p383 = scmp.le.s32.totalorder 2, %s8
    // Predicated region
    $region33: #{relu_grouped_conv2d.1} parent=5 // pred_check
      %p384 = pneg %p383
    $region34: #{relu_grouped_conv2d.1} parent=5 // pred_check_branch
      %386 = sbr.rel (%p384) target = $region36
    $region35: #{relu_grouped_conv2d.1} parent=5 // pred_region
      %s387 = ssub.s32 %s8, 2
      // Predicated region
      $region37: #{relu_grouped_conv2d.1} parent=35 // pred_check
        %p388 = pneg %p105
      $region38: #{relu_grouped_conv2d.1} parent=35 // pred_check_branch
        %390 = sbr.rel (%p388) target = $region40
      $region39: #{relu_grouped_conv2d.1} parent=35 // pred_region
        %p391 = scmp.lt.s32.totalorder %s19, 1
        %s392 = scalar_select %p391, %s19, 1
        %p393 = scmp.lt.s32.totalorder %s20, 1
        %s394 = scalar_select %p393, %s20, 1
        %s395 = smul.addr %s394, 4
        %s396 = smul.addr %s392, 8
        %s397 = sadd.s32 %s395, %s396
        %s398 = smul.addr %s397, 8
        %s399 = scalar_lea.vmem %s2, %s398
      $region40: #{relu_grouped_conv2d.1} parent=35 // pred_fallthru
        _
    $region36: #{relu_grouped_conv2d.1} parent=5 // pred_fallthru
      _
  $region6: #{relu_grouped_conv2d.1} parent=0 // loop_footer
    %s12 = sadd.s32 1, %s8
  $region7: #{relu_grouped_conv2d.1} parent=0 // loop_footer_branch
    %7 = sbr.rel target = $region3
  $region8: #{relu_grouped_conv2d.1} parent=0 // loop_exit
    _

</llo_original>
